<compile_context>
chip_gen: v7x
topology: tpu7x:2x2x1
jax: 0.10.0
libtpu: 0.0.40
codegen_flags: <defaults>
</compile_context>

<pallas_src>
import functools
import math

import jax
import jax.numpy as jnp
from jax.experimental import pallas as pl
from jax.experimental.pallas import tpu as pltpu

LN_EPS = 1e-12                     # HF ViTConfig default layer_norm_eps
_NEG_INF = -1e30


def _round_up(x, m):
    return ((x + m - 1) // m) * m


# ----------------------------------------------------------------------------
# Hardware-aware VMEM budget
# ----------------------------------------------------------------------------
_VMEM_LIMIT = None


def _get_vmem_limit():
    global _VMEM_LIMIT
    if _VMEM_LIMIT is None:
        phys = None
        try:
            info = pltpu.get_tpu_info()
            for attr in ("vmem_capacity_bytes", "vmem_bytes", "vmem_size_bytes"):
                phys = getattr(info, attr, None)
                if phys:
                    break
        except Exception:  # noqa: BLE001 - conservative fallback
            phys = None
        if not phys:
            phys = 64 * 1024 * 1024        # v7x-sized conservative default
        _VMEM_LIMIT = int(min(phys * 3 // 4, 100 * 1024 * 1024))
    return _VMEM_LIMIT


# ----------------------------------------------------------------------------
# pl.Buffered(1) feature probe: single-buffer grid-invariant weights when the
# running JAX/Mosaic supports it, otherwise fall back (and the F picker then
# budgets the weights twice instead of silently overflowing VMEM).
# ----------------------------------------------------------------------------
_BUFFERED1_OK = None


def _buffered1_supported():
    global _BUFFERED1_OK
    if _BUFFERED1_OK is None:
        try:
            def _copy(x_ref, o_ref):
                o_ref[...] = x_ref[...]

            x = jnp.zeros((8, 128), jnp.float32)
            out = pl.pallas_call(
                _copy,
                grid=(1,),
                in_specs=[pl.BlockSpec((8, 128), lambda i: (0, 0),
                                       pipeline_mode=pl.Buffered(1))],
                out_specs=pl.BlockSpec((8, 128), lambda i: (0, 0)),
                out_shape=jax.ShapeDtypeStruct((8, 128), jnp.float32),
            )(x)
            jax.block_until_ready(out)
            _BUFFERED1_OK = True
        except Exception:  # noqa: BLE001 - any failure -> fall back
            _BUFFERED1_OK = False
    return _BUFFERED1_OK


def _const_spec(shape):
    """BlockSpec for a grid-invariant operand (weights, biases, pos tables)."""
    nd = len(shape)
    index_map = lambda i, _nd=nd: (0,) * _nd
    if _buffered1_supported():
        return pl.BlockSpec(shape, index_map, pipeline_mode=pl.Buffered(1))
    return pl.BlockSpec(shape, index_map)


# ----------------------------------------------------------------------------
# Tiling heuristics (VMEM-aware)
# ----------------------------------------------------------------------------
def _mlp_chunk(inter):
    """Chunk size for the MLP intermediate dim (bounds the f32 h1 temporary)."""
    if inter <= 1024:
        return inter
    for c in (1024, 512, 256, 128):
        if inter % c == 0:
            return c
    return inter


def _layer_frame_bytes(s, d, chunk):
    """Conservative per-frame VMEM estimate for the transformer-layer kernel."""
    return 56 * s * d + 16 * s * s + 8 * s * chunk


def _pick_block_frames(n, per_frame_bytes, weight_bytes, vmem_limit):
    """Frames per grid step: amortize overhead, fit VMEM, keep >=2 grid steps."""
    budget = max(vmem_limit - weight_bytes - (4 << 20), per_frame_bytes)
    best = 1
    for f in range(1, n + 1):
        if f > 8:
            break
        if n % f:
            continue
        if n > 1 and n // f < 2:
            continue
        if f * per_frame_bytes <= budget:
            best = f
    return best


def _pick_embed_frames(n, p, kpad, s_pad, d, weight_bytes, vmem_limit):
    per_frame = 2 * (2 * p * kpad + 2 * s_pad * d) + 8 * p * d
    budget = max(vmem_limit // 2 - weight_bytes, per_frame)
    best = 1
    for f in range(1, n + 1):
        if n % f:
            continue
        if n > 1 and n // f < 2:
            continue
        if f * p > 1024:
            break
        if f * per_frame <= budget:
            best = f
    return best


# ----------------------------------------------------------------------------
# Kernels
# ----------------------------------------------------------------------------
def _layernorm(v, g, b):
    mu = jnp.mean(v, axis=-1, keepdims=True)
    var = jnp.mean((v - mu) ** 2, axis=-1, keepdims=True)
    return (v - mu) * jax.lax.rsqrt(var + LN_EPS) * g + b


def _embed_kernel(x_ref, w_ref, b_ref, cls_ref, pos_ref, o_ref, *, s_real):
    # x: (Fp, P, Kpad) bf16, w: (Kpad, D) bf16, b: (1, D) f32,
    # cls: (1, 1, D) f32, pos: (1, S_pad, D) f32  ->  o: (Fp, S_pad, D)
    fp, p, kpad = x_ref.shape
    d = w_ref.shape[1]
    s_pad = o_ref.shape[1]
    emb = (jnp.dot(x_ref[...].reshape(fp * p, kpad), w_ref[...],
                   preferred_element_type=jnp.float32)
           + b_ref[...]).reshape(fp, p, d)
    cls = jnp.broadcast_to(cls_ref[...], (fp, 1, d)).astype(jnp.float32)
    pieces = [cls, emb]
    if s_pad > s_real:
        pieces.append(jnp.zeros((fp, s_pad - s_real, d), jnp.float32))
    out = jnp.concatenate(pieces, axis=1) + pos_ref[...]
    o_ref[...] = out.astype(o_ref.dtype)


def _vit_layer_kernel(x_ref, ln1g_ref, ln1b_ref, wqkv_ref, bqkv_ref, wo_ref,
                      bo_ref, ln2g_ref, ln2b_ref, w1_ref, b1_ref, w2_ref,
                      b2_ref, fg_ref, fb_ref, o_ref, *, num_heads, s_real,
                      mlp_chunk, apply_final_ln):
    """HF-style pre-norm ViT encoder layer over a block of F frames (F,S,D)."""
    f, s, d = x_ref.shape
    hd = d // num_heads
    scale = 1.0 / math.sqrt(hd)

    x = x_ref[...].astype(jnp.float32).reshape(f * s, d)

    # ---- self-attention block (pre-LN), fused QKV projection ----
    xn = _layernorm(x, ln1g_ref[...], ln1b_ref[...])
    qkv = jnp.dot(xn.astype(jnp.bfloat16), wqkv_ref[...],
                  preferred_element_type=jnp.float32) + bqkv_ref[...]
    q = (qkv[:, :d] * scale).reshape(f, s, d).astype(jnp.bfloat16)
    k = qkv[:, d:2 * d].reshape(f, s, d).astype(jnp.bfloat16)
    v = qkv[:, 2 * d:].reshape(f, s, d).astype(jnp.bfloat16)

    if s > s_real:  # mask padded key columns (static decision)
        key_ok = jax.lax.broadcasted_iota(jnp.int32, (1, 1, s), 2) < s_real
        key_bias = jnp.where(key_ok, 0.0, _NEG_INF).astype(jnp.float32)
    else:
        key_bias = None

    heads = []
    for h in range(num_heads):             # static loop; frames are batched
        sl = slice(h * hd, (h + 1) * hd)
        sc = jnp.einsum('fqd,fkd->fqk', q[:, :, sl], k[:, :, sl],
                        preferred_element_type=jnp.float32)
        if key_bias is not None:
            sc = sc + key_bias
        sc = sc - jnp.max(sc, axis=-1, keepdims=True)
        p = jnp.exp(sc)
        p = p / jnp.sum(p, axis=-1, keepdims=True)
        heads.append(jnp.einsum('fqk,fkd->fqd', p.astype(jnp.bfloat16),
                                v[:, :, sl],
                                preferred_element_type=jnp.float32))
    # single full-K output projection (K = D), no per-head K=hd matmuls
    ctx = jnp.concatenate(heads, axis=-1).reshape(f * s, d)
    attn = jnp.dot(ctx.astype(jnp.bfloat16), wo_ref[...],
                   preferred_element_type=jnp.float32) + bo_ref[...]
    x1 = x + attn

    # ---- MLP block (pre-LN), chunked over the intermediate dim ----
    xn2 = _layernorm(x1, ln2g_ref[...], ln2b_ref[...]).astype(jnp.bfloat16)
    inter = w1_ref.shape[1]
    out = x1 + b2_ref[...]
    for c0 in range(0, inter, mlp_chunk):
        c1 = min(c0 + mlp_chunk, inter)
        h1 = jnp.dot(xn2, w1_ref[:, c0:c1],
                     preferred_element_type=jnp.float32) + b1_ref[:, c0:c1]
        h1 = jax.nn.gelu(h1, approximate=False)     # HF ViT uses exact GELU
        out = out + jnp.dot(h1.astype(jnp.bfloat16), w2_ref[c0:c1, :],
                            preferred_element_type=jnp.float32)

    if apply_final_ln:                      # ViTModel.layernorm fused in
        out = _layernorm(out, fg_ref[...], fb_ref[...])

    o_ref[...] = out.reshape(f, s, d).astype(o_ref.dtype)


def _temporal_pool_kernel(x_ref, pos_ref, o_ref):
    # x: (1, G, tp, P, D), pos: (G, P, D) -> o: (1, G, P, D)
    x = x_ref[0].astype(jnp.float32)
    tp = x.shape[1]
    acc = x[:, 0]
    for t in range(1, tp):
        acc = acc + x[:, t]
    o_ref[0] = acc * (1.0 / tp) + pos_ref[...]


# ----------------------------------------------------------------------------
# Pallas wrappers
# ----------------------------------------------------------------------------
def patch_embed_fused(patches, w, b, cls, pos, *, s_real, out_dtype):
    n, p, kpad = patches.shape
    d = w.shape[1]
    s_pad = pos.shape[1]
    wbytes = int(w.size) * 2 + int(b.size + cls.size + pos.size) * 4
    if not _buffered1_supported():
        wbytes *= 2
    fp = _pick_embed_frames(n, p, kpad, s_pad, d, wbytes, _get_vmem_limit())
    kern = functools.partial(_embed_kernel, s_real=s_real)
    return pl.pallas_call(
        kern,
        grid=(n // fp,),
        in_specs=[pl.BlockSpec((fp, p, kpad), lambda i: (i, 0, 0)),
                  _const_spec(w.shape), _const_spec(b.shape),
                  _const_spec(cls.shape), _const_spec(pos.shape)],
        out_specs=pl.BlockSpec((fp, s_pad, d), lambda i: (i, 0, 0)),
        out_shape=jax.ShapeDtypeStruct((n, s_pad, d), out_dtype),
        compiler_params=pltpu.CompilerParams(
            dimension_semantics=("parallel",),
            vmem_limit_bytes=_get_vmem_limit()),
    )(patches, w, b, cls, pos)


_LAYER_WEIGHT_KEYS = ("ln1_g", "ln1_b", "wqkv", "bqkv", "wo", "bo",
                      "ln2_g", "ln2_b", "w1", "b1", "w2", "b2")


def vit_layer_stack(x, layers, final_g, final_b, *, num_heads, s_real):
    n, s, d = x.shape
    inter = layers[0]["w1"].shape[1]
    chunk = _mlp_chunk(inter)
    vmem_limit = _get_vmem_limit()
    wbytes = sum(int(layers[0][k].size) * layers[0][k].dtype.itemsize
                 for k in _LAYER_WEIGHT_KEYS)
    wbytes += int(final_g.size + final_b.size) * 4
    if not _buffered1_supported():
        wbytes *= 2                 # fallback double-buffers invariant weights
    per_frame = _layer_frame_bytes(s, d, chunk)
    f = _pick_block_frames(n, per_frame, wbytes, vmem_limit)
    x_spec = pl.BlockSpec((f, s, d), lambda i: (i, 0, 0))
    n_layers = len(layers)
    for li, lp in enumerate(layers):
        last = li == n_layers - 1
        weights = [lp[k] for k in _LAYER_WEIGHT_KEYS] + [final_g, final_b]
        kern = functools.partial(
            _vit_layer_kernel, num_heads=num_heads, s_real=s_real,
            mlp_chunk=chunk, apply_final_ln=last)
        # bf16 residual stream between layers; f32 out of the last (LN'd) layer
        out_dtype = jnp.float32 if last else jnp.bfloat16
        x = pl.pallas_call(
            kern,
            grid=(n // f,),
            in_specs=[x_spec] + [_const_spec(wa.shape) for wa in weights],
            out_specs=x_spec,
            out_shape=jax.ShapeDtypeStruct((n, s, d), out_dtype),
            compiler_params=pltpu.CompilerParams(
                dimension_semantics=("parallel",),
                vmem_limit_bytes=vmem_limit),
        )(x, *weights)
    return x


def temporal_pool_add_pos(x_grouped, pos):
    b, g, tp, p, d = x_grouped.shape
    return pl.pallas_call(
        _temporal_pool_kernel,
        grid=(b,),
        in_specs=[pl.BlockSpec((1, g, tp, p, d), lambda i: (i, 0, 0, 0, 0)),
                  _const_spec(pos.shape)],
        out_specs=pl.BlockSpec((1, g, p, d), lambda i: (i, 0, 0, 0)),
        out_shape=jax.ShapeDtypeStruct((b, g, p, d), jnp.float32),
        compiler_params=pltpu.CompilerParams(
            dimension_semantics=("parallel",),
            vmem_limit_bytes=_get_vmem_limit()),
    )(x_grouped, pos)


# ----------------------------------------------------------------------------
# Parameter init (deterministic; matmul weights stored bf16, fused QKV,
# patch-embed contraction dim zero-padded to a 128 multiple)
# ----------------------------------------------------------------------------
def init_params(key, *, image_size, patch_size, num_channels, hidden_size,
                num_layers, mlp_ratio, max_temporal_positions=1000):
    ps, c, d = patch_size, num_channels, hidden_size
    inter = int(hidden_size * mlp_ratio)
    p = (image_size // ps) ** 2
    k_real = c * ps * ps
    k_pad = _round_up(k_real, 128)
    keys = jax.random.split(key, 4 + num_layers)

    def w_init(kk, shape):
        return jax.random.normal(kk, shape, jnp.float32) * 0.02

    # Conv2d(D, C, ps, ps) in PyTorch layout, reshaped to a matmul weight.
    conv_w = w_init(keys[0], (d, c, ps, ps))
    patch_w = conv_w.reshape(d, k_real).T                       # (K, D)
    patch_w = jnp.pad(patch_w, ((0, k_pad - k_real), (0, 0)))   # zero pad K

    params = {
        "patch_w": patch_w.astype(jnp.bfloat16),
        "patch_b": jnp.zeros((1, d), jnp.float32),
        "cls": w_init(keys[1], (1, 1, d)),
        "pos_embed": w_init(keys[2], (1, p + 1, d)),
        "final_ln_g": jnp.ones((1, d), jnp.float32),
        "final_ln_b": jnp.zeros((1, d), jnp.float32),
        "temporal_pos": w_init(keys[3], (1, max_temporal_positions, d)),
        "layers": [],
    }
    for li in range(num_layers):
        lk = jax.random.split(keys[4 + li], 6)
        wq, wk, wv = (w_init(lk[0], (d, d)), w_init(lk[1], (d, d)),
                      w_init(lk[2], (d, d)))
        params["layers"].append({
            "ln1_g": jnp.ones((1, d), jnp.float32),
            "ln1_b": jnp.zeros((1, d), jnp.float32),
            "wqkv": jnp.concatenate([wq, wk, wv], axis=1).astype(jnp.bfloat16),
            "bqkv": jnp.zeros((1, 3 * d), jnp.float32),
            "wo": w_init(lk[3], (d, d)).astype(jnp.bfloat16),
            "bo": jnp.zeros((1, d), jnp.float32),
            "ln2_g": jnp.ones((1, d), jnp.float32),
            "ln2_b": jnp.zeros((1, d), jnp.float32),
            "w1": w_init(lk[4], (d, inter)).astype(jnp.bfloat16),
            "b1": jnp.zeros((1, inter), jnp.float32),
            "w2": w_init(lk[5], (inter, d)).astype(jnp.bfloat16),
            "b2": jnp.zeros((1, d), jnp.float32),
        })
    return params


# ----------------------------------------------------------------------------
# Full forward (mirrors VideoTransformerEncoder.forward)
# ----------------------------------------------------------------------------
def video_transformer_encoder_forward(params, video_frames, *, patch_size,
                                      temporal_patch_size, num_heads):
    b, t, h, w, c = video_frames.shape
    n = b * t
    ps = patch_size
    ph, pw = h // ps, w // ps
    p = ph * pw
    d = params["cls"].shape[-1]

    # ---- ViT patch extraction (== NCHW conv with kernel=stride=ps) ----
    frames = video_frames.reshape(n, h, w, c).astype(jnp.float32)
    patches = (frames.reshape(n, ph, ps, pw, ps, c)
               .transpose(0, 1, 3, 5, 2, 4)            # (N, ph, pw, C, ps, ps)
               .reshape(n, p, c * ps * ps))
    k_real = c * ps * ps
    k_pad = params["patch_w"].shape[0]
    if k_pad > k_real:
        patches = jnp.pad(patches, ((0, 0), (0, 0), (0, k_pad - k_real)))

    # ---- fused patch-embed + CLS prepend + pos add + S padding ----
    s_real = p + 1
    s_pad = _round_up(s_real, 8)          # sublane constraint only, not 128
    pos = params["pos_embed"]
    if s_pad > s_real:
        pos = jnp.pad(pos, ((0, 0), (0, s_pad - s_real), (0, 0)))
    x = patch_embed_fused(patches.astype(jnp.bfloat16), params["patch_w"],
                          params["patch_b"], params["cls"], pos,
                          s_real=s_real, out_dtype=jnp.bfloat16)  # (N,S_pad,D)

    # ---- transformer layers (final LayerNorm fused into the last one) ----
    x = vit_layer_stack(x, params["layers"], params["final_ln_g"],
                        params["final_ln_b"], num_heads=num_heads,
                        s_real=s_real)                  # (N, S_pad, D) f32

    # ---- drop CLS + padding, temporal grouping + mean, temporal pos ----
    x = x[:, 1:s_real, :].reshape(b, t, p, d)
    tp = temporal_patch_size
    t_eff = t
    if t_eff % tp != 0:
        pad = tp - t_eff % tp
        x = jnp.pad(x, ((0, 0), (0, pad), (0, 0), (0, 0)))
        t_eff += pad
    g = t_eff // tp
    x = x.reshape(b, g, tp, p, d)
    max_pos = params["temporal_pos"].shape[1]
    if g * p <= max_pos:
        pos_t = params["temporal_pos"][0, : g * p, :].reshape(g, p, d)
    else:  # reference skips the addition in this case
        pos_t = jnp.zeros((g, p, d), jnp.float32)
    out = temporal_pool_add_pos(x, pos_t)               # (B, G, P, D)
    return out.reshape(b, g * p, d)                     # (B, num_patches, D)


# ----------------------------------------------------------------------------
if __name__ == "__main__":
    # small config consistent with the module
    IMAGE_SIZE = 16
    PATCH_SIZE = 8
    TEMPORAL_PATCH_SIZE = 2
    NUM_CHANNELS = 3
    HIDDEN_SIZE = 32
    NUM_LAYERS = 2
    NUM_HEADS = 4
    MLP_RATIO = 4.0
    B, T = 2, 4

    key = jax.random.PRNGKey(0)
    key_params, key_video = jax.random.split(key)

    params = init_params(
        key_params,
        image_size=IMAGE_SIZE, patch_size=PATCH_SIZE,
        num_channels=NUM_CHANNELS, hidden_size=HIDDEN_SIZE,
        num_layers=NUM_LAYERS, mlp_ratio=MLP_RATIO,
    )
    video = jax.random.normal(
        key_video, (B, T, IMAGE_SIZE, IMAGE_SIZE, NUM_CHANNELS), jnp.float32)

    out = video_transformer_encoder_forward(
        params, video,
        patch_size=PATCH_SIZE,
        temporal_patch_size=TEMPORAL_PATCH_SIZE,
        num_heads=NUM_HEADS,
    )
    out = jax.block_until_ready(out)

    expected_patches = (T // TEMPORAL_PATCH_SIZE) * (IMAGE_SIZE // PATCH_SIZE) ** 2
    assert out.shape == (B, expected_patches, HIDDEN_SIZE), out.shape
    assert bool(jnp.all(jnp.isfinite(out)))
    print("KERNEL_OK")
</pallas_src>

<mosaic_0001>
module attributes {stable_mosaic.version = 11 : i64} {
  func.func @_copy(%arg0: i32, %arg1: memref<8x128xf32, #tpu.memory_space<vmem>>, %arg2: memref<8x128xf32, #tpu.memory_space<vmem>>) attributes {dimension_semantics = [#tpu.dimension_semantics<arbitrary>], iteration_bounds = array<i64: 1>, scalar_prefetch = 0 : i64, scratch_operands = 0 : i64, tpu.core_type = #tpu.core_type<tc>, window_params = [{pipeline_mode = #tpu.pipeline_mode<synchronous>, transform_indices = @transform_0, window_bounds = array<i64: 8, 128>}, {pipeline_mode = #tpu.pipeline_mode<synchronous>, transform_indices = @transform_1, window_bounds = array<i64: 8, 128>}]} {
    %c0 = arith.constant 0 : index
    %c0_0 = arith.constant 0 : index
    %0 = vector.load %arg1[%c0, %c0_0] : memref<8x128xf32, #tpu.memory_space<vmem>>, vector<8x128xf32>
    %c0_1 = arith.constant 0 : index
    %c0_2 = arith.constant 0 : index
    %1 = vector.load %arg2[%c0_1, %c0_2] : memref<8x128xf32, #tpu.memory_space<vmem>>, vector<8x128xf32>
    tpu.vector_store %arg2[%c0_1, %c0_2], %0 {strides = array<i32>} : memref<8x128xf32, #tpu.memory_space<vmem>>, vector<8x128xf32>,
    return
  }
  func.func @transform_0(%arg0: i32) -> (i32, i32) {
    %c0_i32 = arith.constant 0 : i32
    %c0_i32_0 = arith.constant 0 : i32
    %c0_i32_1 = arith.constant 0 : i32
    return %c0_i32, %c0_i32_0 : i32, i32
  }
  func.func @transform_1(%arg0: i32) -> (i32, i32) {
    %c0_i32 = arith.constant 0 : i32
    %c0_i32_0 = arith.constant 0 : i32
    %c0_i32_1 = arith.constant 0 : i32
    return %c0_i32, %c0_i32_0 : i32, i32
  }
}

module attributes {stable_mosaic.version = 11 : i64} {
  func.func @_embed_kernel(%arg0: i32, %arg1: memref<4x4x256xbf16, #tpu.memory_space<vmem>>, %arg2: memref<256x32xbf16, #tpu.memory_space<vmem>>, %arg3: memref<1x32xf32, #tpu.memory_space<vmem>>, %arg4: memref<1x1x32xf32, #tpu.memory_space<vmem>>, %arg5: memref<1x8x32xf32, #tpu.memory_space<vmem>>, %arg6: memref<4x8x32xbf16, #tpu.memory_space<vmem>>) attributes {dimension_semantics = [#tpu.dimension_semantics<parallel>], iteration_bounds = array<i64: 2>, scalar_prefetch = 0 : i64, scratch_operands = 0 : i64, tpu.core_type = #tpu.core_type<tc>, window_params = [{transform_indices = @transform_0, window_bounds = array<i64: 4, 4, 256>}, {pipeline_mode = #tpu.pipeline_mode<synchronous>, transform_indices = @transform_1, window_bounds = array<i64: 256, 32>}, {pipeline_mode = #tpu.pipeline_mode<synchronous>, transform_indices = @transform_2, window_bounds = array<i64: 1, 32>}, {pipeline_mode = #tpu.pipeline_mode<synchronous>, transform_indices = @transform_3, window_bounds = array<i64: 1, 1, 32>}, {pipeline_mode = #tpu.pipeline_mode<synchronous>, transform_indices = @transform_4, window_bounds = array<i64: 1, 8, 32>}, {transform_indices = @transform_5, window_bounds = array<i64: 4, 8, 32>}]} {
    %c0 = arith.constant 0 : index
    %c0_0 = arith.constant 0 : index
    %c0_1 = arith.constant 0 : index
    %0 = vector.load %arg1[%c0, %c0_0, %c0_1] : memref<4x4x256xbf16, #tpu.memory_space<vmem>>, vector<4x4x256xbf16>
    %1 = vector.shape_cast %0 : vector<4x4x256xbf16> to vector<16x256xbf16>
    %c0_2 = arith.constant 0 : index
    %c0_3 = arith.constant 0 : index
    %2 = vector.load %arg2[%c0_2, %c0_3] : memref<256x32xbf16, #tpu.memory_space<vmem>>, vector<256x32xbf16>
    %cst = arith.constant dense<0.000000e+00> : vector<16x32xf32>
    %3 = tpu.matmul %1, %2, %cst {dimension_numbers = #tpu.dot_dimension_numbers<[1], [0], [0], [1], [0, 0, 1, 1], [], []>} : vector<16x256xbf16>, vector<256x32xbf16>, vector<16x32xf32> -> vector<16x32xf32>
    %c0_4 = arith.constant 0 : index
    %c0_5 = arith.constant 0 : index
    %4 = vector.load %arg3[%c0_4, %c0_5] : memref<1x32xf32, #tpu.memory_space<vmem>>, vector<1x32xf32>
    %5 = vector.broadcast %4 : vector<1x32xf32> to vector<16x32xf32>
    %6 = arith.addf %3, %5 : vector<16x32xf32>
    %7 = vector.shape_cast %6 : vector<16x32xf32> to vector<4x4x32xf32>
    %c0_6 = arith.constant 0 : index
    %c0_7 = arith.constant 0 : index
    %c0_8 = arith.constant 0 : index
    %8 = vector.load %arg4[%c0_6, %c0_7, %c0_8] : memref<1x1x32xf32, #tpu.memory_space<vmem>>, vector<1x1x32xf32>
    %9 = vector.shape_cast %8 : vector<1x1x32xf32> to vector<1x1x32xf32>
    %10 = vector.broadcast %9 : vector<1x1x32xf32> to vector<4x1x32xf32>
    %cst_9 = arith.constant 0.000000e+00 : f32
    %11 = vector.broadcast %cst_9 : f32 to vector<4x3x32xf32>
    %12 = tpu.concatenate %10, %7, %11 in 1 : vector<4x1x32xf32>, vector<4x4x32xf32>, vector<4x3x32xf32> -> vector<4x8x32xf32>
    %c0_10 = arith.constant 0 : index
    %c0_11 = arith.constant 0 : index
    %c0_12 = arith.constant 0 : index
    %13 = vector.load %arg5[%c0_10, %c0_11, %c0_12] : memref<1x8x32xf32, #tpu.memory_space<vmem>>, vector<1x8x32xf32>
    %14 = vector.broadcast %13 : vector<1x8x32xf32> to vector<4x8x32xf32>
    %15 = arith.addf %12, %14 : vector<4x8x32xf32>
    %16 = arith.truncf %15 : vector<4x8x32xf32> to vector<4x8x32xbf16>
    %c0_13 = arith.constant 0 : index
    %c0_14 = arith.constant 0 : index
    %c0_15 = arith.constant 0 : index
    %17 = vector.load %arg6[%c0_13, %c0_14, %c0_15] : memref<4x8x32xbf16, #tpu.memory_space<vmem>>, vector<4x8x32xbf16>
    tpu.vector_store %arg6[%c0_13, %c0_14, %c0_15], %16 {strides = array<i32>} : memref<4x8x32xbf16, #tpu.memory_space<vmem>>, vector<4x8x32xbf16>,
    return
  }
  func.func @transform_0(%arg0: i32) -> (i32, i32, i32) {
    %c0_i32 = arith.constant 0 : i32
    %c0_i32_0 = arith.constant 0 : i32
    %c0_i32_1 = arith.constant 0 : i32
    return %arg0, %c0_i32, %c0_i32_0 : i32, i32, i32
  }
  func.func @transform_1(%arg0: i32) -> (i32, i32) {
    %c0_i32 = arith.constant 0 : i32
    %c0_i32_0 = arith.constant 0 : i32
    %c0_i32_1 = arith.constant 0 : i32
    return %c0_i32, %c0_i32_0 : i32, i32
  }
  func.func @transform_2(%arg0: i32) -> (i32, i32) {
    %c0_i32 = arith.constant 0 : i32
    %c0_i32_0 = arith.constant 0 : i32
    %c0_i32_1 = arith.constant 0 : i32
    return %c0_i32, %c0_i32_0 : i32, i32
  }
  func.func @transform_3(%arg0: i32) -> (i32, i32, i32) {
    %c0_i32 = arith.constant 0 : i32
    %c0_i32_0 = arith.constant 0 : i32
    %c0_i32_1 = arith.constant 0 : i32
    %c0_i32_2 = arith.constant 0 : i32
    return %c0_i32, %c0_i32_0, %c0_i32_1 : i32, i32, i32
  }
  func.func @transform_4(%arg0: i32) -> (i32, i32, i32) {
    %c0_i32 = arith.constant 0 : i32
    %c0_i32_0 = arith.constant 0 : i32
    %c0_i32_1 = arith.constant 0 : i32
    %c0_i32_2 = arith.constant 0 : i32
    return %c0_i32, %c0_i32_0, %c0_i32_1 : i32, i32, i32
  }
  func.func @transform_5(%arg0: i32) -> (i32, i32, i32) {
    %c0_i32 = arith.constant 0 : i32
    %c0_i32_0 = arith.constant 0 : i32
    %c0_i32_1 = arith.constant 0 : i32
    return %arg0, %c0_i32, %c0_i32_0 : i32, i32, i32
  }
}

</mosaic_0001>

<llo_original>
// kernel: tpu_custom_call.1
$region0: #{tpu_custom_call.1}
  #allocation0 [shape = 'u32[]', space=smem, size = 0x4, offset = 0x4, fixed_abs, tag = 'smem constant byte address 0x4 - core index']
  #allocation1 [shape = 'u32[144,128]{1,0:T(1,128)}', space=vmem, size = 0x12000, scoped, tag = 'internal scratch']
  %s0 = inlined_call_operand.hbm [shape: f32[8,128], index: 0, kind: input, shape index: {}]
  %s1 = inlined_call_operand.hbm [shape: f32[8,128], index: 1, kind: output, shape index: {}]
  %s2 = sld [smem:[#allocation0]]
  $region18: #{tpu_custom_call.1} parent=0
    _
  %s4 = ssub.s32 1, %s2
  %s5 = scalar_select 0, %s4, %s2
  $region1: #{tpu_custom_call.1} parent=0
    #allocation2 [shape = 'u8[4096]{0}', space=vmem, size = 0x1000, scoped, tag = 'input window, operand 0, single buffered']
    #allocation3 [shape = 's32[1]{0}', space=sflag, size = 0x4, scoped, tag = 'scoped memory for tpu_custom_call.1']
    #allocation4 [shape = 's32[1]{0}', space=sflag, size = 0x4, scoped, tag = 'scoped memory for tpu_custom_call.1']
    #allocation5 [shape = 'u8[4096]{0}', space=vmem, size = 0x1000, scoped, tag = 'output window, operand 0, single buffered']
    %6 = vsyncpa [#allocation3], 0
    %7 = vsyncpa [#allocation4], 0
    // Predicated region
    $region2: #{tpu_custom_call.1} parent=1 // pred_check
      _
    $region3: #{tpu_custom_call.1} parent=1 // pred_check_branch
      %9 = sbr.rel (0) target = $region5
    $region4: #{tpu_custom_call.1} parent=1 // pred_region
      %s11 = ssub.s32 128, 128
      %12 = vsyncadd [#allocation3], %s11
      %s14 = sshll.u32 [#allocation2], 4
      %s15 = int_to_ptr.vmem [resolvable:$true] %s14
      %17 = dma.hbm_to_vmem [thread:$0]  %s0, 128, %s15, [#allocation3]
    $region5: #{tpu_custom_call.1} parent=1 // pred_fallthru
      _
    // Predicated region
    $region6: #{tpu_custom_call.1} parent=1 // pred_check
      _
    $region7: #{tpu_custom_call.1} parent=1 // pred_check_branch
      %19 = sbr.rel (0) target = $region9
    $region8: #{tpu_custom_call.1} parent=1 // pred_region
      %20 = dma.done [#allocation3], 128
    $region9: #{tpu_custom_call.1} parent=1 // pred_fallthru
      _
    %v21 = vld [vmem:[#allocation2] sm:$0xff]
    %22 = vst [vmem:[#allocation5] sm:$0xff] %v21
    // Predicated region
    $region10: #{tpu_custom_call.1} parent=1 // pred_check
      _
    $region11: #{tpu_custom_call.1} parent=1 // pred_check_branch
      %24 = sbr.rel (0) target = $region13
    $region12: #{tpu_custom_call.1} parent=1 // pred_region
      %s26 = ssub.s32 128, 128
      %27 = vsyncadd [#allocation4], %s26
      %s29 = sshll.u32 [#allocation5], 4
      %s30 = int_to_ptr.vmem [resolvable:$true] %s29
      %32 = dma.vmem_to_hbm [thread:$0]  %s30, 128, %s1, [#allocation4]
    $region13: #{tpu_custom_call.1} parent=1 // pred_fallthru
      _
    // Predicated region
    $region14: #{tpu_custom_call.1} parent=1 // pred_check
      _
    $region15: #{tpu_custom_call.1} parent=1 // pred_check_branch
      %34 = sbr.rel (0) target = $region17
    $region16: #{tpu_custom_call.1} parent=1 // pred_region
      %35 = dma.done [#allocation4], 128
    $region17: #{tpu_custom_call.1} parent=1 // pred_fallthru
      _
    %36 = vsyncpa [#allocation3], 1
    %37 = vsyncpa [#allocation4], 1

// kernel: tpu_custom_call.1
$region0: #{tpu_custom_call.1}
  #allocation0 [shape = 'u32[]', space=smem, size = 0x4, offset = 0x4, fixed_abs, tag = 'smem constant byte address 0x4 - core index']
  #allocation1 [shape = 'u32[144,128]{1,0:T(1,128)}', space=vmem, size = 0x12000, scoped, tag = 'internal scratch']
  %s0 = inlined_call_operand.vmem [shape: bf16[8,4,256], index: 0, kind: input, shape index: {}]
  %s1 = inlined_call_operand.vmem [shape: bf16[256,32], index: 1, kind: input, shape index: {}]
  %s2 = inlined_call_operand.vmem [shape: f32[1,32], index: 2, kind: input, shape index: {}]
  %s3 = inlined_call_operand.vmem [shape: f32[1,1,32], index: 3, kind: input, shape index: {}]
  %s4 = inlined_call_operand.vmem [shape: f32[1,8,32], index: 4, kind: input, shape index: {}]
  %s5 = inlined_call_operand.hbm [shape: bf16[8,8,32], index: 5, kind: output, shape index: {}]
  %s6 = sld [smem:[#allocation0]]
  $region53: #{tpu_custom_call.1} parent=0
    _
  %s8 = ssub.s32 1, %s6
  %s9 = scalar_select 0, %s8, %s6
  $region1: #{tpu_custom_call.1} parent=0
    #allocation2 [shape = 'u8[16384]{0}', space=vmem, size = 0x4000, scoped, tag = 'output window, operand 0']
    #allocation3 [shape = 's32[2]{0}', space=sflag, size = 0x8, scoped, tag = 'scoped memory for tpu_custom_call.1']
    %10 = vsyncpa [#allocation3], 0
    %s11 = scalar_lea.sflag [#allocation3], 1
    %12 = vsyncpa %s11, 0
    loop: start=0, step=1, limit=4
    $region2: #{tpu_custom_call.1} parent=1 // loop_pre_header
      _
    $region3: #{tpu_custom_call.1} parent=1 // loop_header
      %s14 = sphi 0, %s18
      %p15 = scmp.ge.s32.totalorder %s14, 4
      %s24 = sphi 0, %s26
      %s27 = sphi 0, %s24
      %s28 = sphi 0, %s27
      %s44 = sphi 0, %s28
      %s48 = sphi 0, %s48
      %s50 = sphi 0, %s48
      %s51 = sphi 0, %s50
      %s65 = sphi 0, %s51
      %s69 = sphi 0, %s69
      %s71 = sphi 0, %s69
      %s72 = sphi 0, %s71
      %s86 = sphi 0, %s72
      %s90 = sphi 0, %s90
      %s92 = sphi 0, %s90
      %s93 = sphi 0, %s92
      %s107 = sphi 0, %s93
      %s111 = sphi 0, %s111
      %s113 = sphi 0, %s111
      %s114 = sphi 0, %s113
      %s128 = sphi 0, %s114
      %s134 = sphi 0, %s136
      %s137 = sphi 0, %s134
      %s138 = sphi 0, %s137
      %s154 = sphi 0, %s138
    $region4: #{tpu_custom_call.1} parent=1 // loop_header_branch
      %17 = sbr.rel (%p15) target = $region8
    $region5: #{tpu_custom_call.1} parent=1 // loop_body
      %s19 = ssub.s32 %s14, 1
      %s20 = ssub.s32 %s14, 2
      %s21 = sadd.s32 %s14, 1
      %s22 = ssub.s32 %s14, %s21
      %p23 = scmp.eq.s32.totalorder %s22, 0
      %s25 = sadd.s32 %s24, 1
      %s26 = scalar_select %p23, %s24, %s25
      %p29 = pneg %p23
      %p30 = scmp.eq.s32.totalorder %s14, 1
      %p31 = por %p29, %p30
      %p32 = scmp.ne.s32.totalorder %s24, %s27
      %p33 = scmp.eq.s32.totalorder %s14, 0
      %p34 = por %p32, %p33
      %p35 = scmp.ne.s32.totalorder %s24, %s27
      %p36 = scmp.eq.s32.totalorder %s19, 1
      %p37 = por %p35, %p36
      %p38 = scmp.ne.s32.totalorder %s27, %s28
      %p39 = scmp.eq.s32.totalorder %s19, 0
      %p40 = por %p38, %p39
      %p41 = scmp.ne.s32.totalorder %s27, %s28
      %p42 = scmp.eq.s32.totalorder %s20, 1
      %p43 = por %p41, %p42
      %p45 = scmp.ne.s32.totalorder %s28, %s44
      %p46 = scmp.eq.s32.totalorder %s20, 0
      %p47 = por %p45, %p46
      %s49 = sadd.s32 %s48, 1
      %p52 = scmp.eq.s32.totalorder %s14, 1
      %p53 = scmp.ne.s32.totalorder %s48, %s50
      %p54 = scmp.eq.s32.totalorder %s14, 0
      %p55 = por %p53, %p54
      %p56 = scmp.ne.s32.totalorder %s48, %s50
      %p57 = scmp.eq.s32.totalorder %s19, 1
      %p58 = por %p56, %p57
      %p59 = scmp.ne.s32.totalorder %s50, %s51
      %p60 = scmp.eq.s32.totalorder %s19, 0
      %p61 = por %p59, %p60
      %p62 = scmp.ne.s32.totalorder %s50, %s51
      %p63 = scmp.eq.s32.totalorder %s20, 1
      %p64 = por %p62, %p63
      %p66 = scmp.ne.s32.totalorder %s51, %s65
      %p67 = scmp.eq.s32.totalorder %s20, 0
      %p68 = por %p66, %p67
      %s70 = sadd.s32 %s69, 1
      %p73 = scmp.eq.s32.totalorder %s14, 1
      %p74 = scmp.ne.s32.totalorder %s69, %s71
      %p75 = scmp.eq.s32.totalorder %s14, 0
      %p76 = por %p74, %p75
      %p77 = scmp.ne.s32.totalorder %s69, %s71
      %p78 = scmp.eq.s32.totalorder %s19, 1
      %p79 = por %p77, %p78
      %p80 = scmp.ne.s32.totalorder %s71, %s72
      %p81 = scmp.eq.s32.totalorder %s19, 0
      %p82 = por %p80, %p81
      %p83 = scmp.ne.s32.totalorder %s71, %s72
      %p84 = scmp.eq.s32.totalorder %s20, 1
      %p85 = por %p83, %p84
      %p87 = scmp.ne.s32.totalorder %s72, %s86
      %p88 = scmp.eq.s32.totalorder %s20, 0
      %p89 = por %p87, %p88
      %s91 = sadd.s32 %s90, 1
      %p94 = scmp.eq.s32.totalorder %s14, 1
      %p95 = scmp.ne.s32.totalorder %s90, %s92
      %p96 = scmp.eq.s32.totalorder %s14, 0
      %p97 = por %p95, %p96
      %p98 = scmp.ne.s32.totalorder %s90, %s92
      %p99 = scmp.eq.s32.totalorder %s19, 1
      %p100 = por %p98, %p99
      %p101 = scmp.ne.s32.totalorder %s92, %s93
      %p102 = scmp.eq.s32.totalorder %s19, 0
      %p103 = por %p101, %p102
      %p104 = scmp.ne.s32.totalorder %s92, %s93
      %p105 = scmp.eq.s32.totalorder %s20, 1
      %p106 = por %p104, %p105
      %p108 = scmp.ne.s32.totalorder %s93, %s107
      %p109 = scmp.eq.s32.totalorder %s20, 0
      %p110 = por %p108, %p109
      %s112 = sadd.s32 %s111, 1
      %p115 = scmp.eq.s32.totalorder %s14, 1
      %p116 = scmp.ne.s32.totalorder %s111, %s113
      %p117 = scmp.eq.s32.totalorder %s14, 0
      %p118 = por %p116, %p117
      %p119 = scmp.ne.s32.totalorder %s111, %s113
      %p120 = scmp.eq.s32.totalorder %s19, 1
      %p121 = por %p119, %p120
      %p122 = scmp.ne.s32.totalorder %s113, %s114
      %p123 = scmp.eq.s32.totalorder %s19, 0
      %p124 = por %p122, %p123
      %p125 = scmp.ne.s32.totalorder %s113, %s114
      %p126 = scmp.eq.s32.totalorder %s20, 1
      %p127 = por %p125, %p126
      %p129 = scmp.ne.s32.totalorder %s114, %s128
      %p130 = scmp.eq.s32.totalorder %s20, 0
      %p131 = por %p129, %p130
      %s132 = ssub.s32 %s14, %s21
      %p133 = scmp.eq.s32.totalorder %s132, 0
      %s135 = sadd.s32 %s134, 1
      %s136 = scalar_select %p133, %s134, %s135
      %p139 = pneg %p133
      %p140 = scmp.eq.s32.totalorder %s14, 1
      %p141 = por %p139, %p140
      %p142 = scmp.ne.s32.totalorder %s134, %s137
      %p143 = scmp.eq.s32.totalorder %s14, 0
      %p144 = por %p142, %p143
      %p145 = scmp.ne.s32.totalorder %s134, %s137
      %p146 = scmp.eq.s32.totalorder %s19, 1
      %p147 = por %p145, %p146
      %p148 = scmp.ne.s32.totalorder %s137, %s138
      %p149 = scmp.eq.s32.totalorder %s19, 0
      %p150 = por %p148, %p149
      %p151 = scmp.ne.s32.totalorder %s137, %s138
      %p152 = scmp.eq.s32.totalorder %s20, 1
      %p153 = por %p151, %p152
      %p155 = scmp.ne.s32.totalorder %s138, %s154
      %p156 = scmp.eq.s32.totalorder %s20, 0
      %p157 = por %p155, %p156
      %p158 = scmp.le.s32.totalorder 1, %s14
      %p159 = scmp.lt.s32.totalorder %s14, 3
      %p160 = pnand %p158, %p159
      %p161 = pneg %p160
      // Predicated region
      $region9: #{tpu_custom_call.1} parent=5 // pred_check
        _
      $region10: #{tpu_custom_call.1} parent=5 // pred_check_branch
        %163 = sbr.rel (%p160) target = $region12
      $region11: #{tpu_custom_call.1} parent=5 // pred_region
        %s164 = ssub.s32 %s14, 1
        // Predicated region
        $region13: #{tpu_custom_call.1} parent=11 // pred_check
          %p165 = pneg %p61
        $region14: #{tpu_custom_call.1} parent=11 // pred_check_branch
          %167 = sbr.rel (%p165) target = $region16
        $region15: #{tpu_custom_call.1} parent=11 // pred_region
          _
        $region16: #{tpu_custom_call.1} parent=11 // pred_fallthru
          _
        // Predicated region
        $region17: #{tpu_custom_call.1} parent=11 // pred_check
          %p168 = pneg %p82
        $region18: #{tpu_custom_call.1} parent=11 // pred_check_branch
          %170 = sbr.rel (%p168) target = $region20
        $region19: #{tpu_custom_call.1} parent=11 // pred_region
          _
        $region20: #{tpu_custom_call.1} parent=11 // pred_fallthru
          _
        // Predicated region
        $region21: #{tpu_custom_call.1} parent=11 // pred_check
          %p171 = pneg %p103
        $region22: #{tpu_custom_call.1} parent=11 // pred_check_branch
          %173 = sbr.rel (%p171) target = $region24
        $region23: #{tpu_custom_call.1} parent=11 // pred_region
          _
        $region24: #{tpu_custom_call.1} parent=11 // pred_fallthru
          _
        // Predicated region
        $region25: #{tpu_custom_call.1} parent=11 // pred_check
          %p174 = pneg %p124
        $region26: #{tpu_custom_call.1} parent=11 // pred_check_branch
          %176 = sbr.rel (%p174) target = $region28
        $region27: #{tpu_custom_call.1} parent=11 // pred_region
          _
        $region28: #{tpu_custom_call.1} parent=11 // pred_fallthru
          _
      $region12: #{tpu_custom_call.1} parent=5 // pred_fallthru
        _
      %p177 = scmp.lt.s32.totalorder %s14, 2
      // Predicated region
      $region29: #{tpu_custom_call.1} parent=5 // pred_check
        %p178 = pneg %p177
      $region30: #{tpu_custom_call.1} parent=5 // pred_check_branch
        %180 = sbr.rel (%p178) target = $region32
      $region31: #{tpu_custom_call.1} parent=5 // pred_region
        // Predicated region
        $region33: #{tpu_custom_call.1} parent=31 // pred_check
          %p181 = pneg %p34
        $region34: #{tpu_custom_call.1} parent=31 // pred_check_branch
          %183 = sbr.rel (%p181) target = $region36
        $region35: #{tpu_custom_call.1} parent=31 // pred_region
          %s184 = smul.u32 4, %s14
          %p185 = scmp.lt.s32.totalorder %s184, 7
          %s186 = scalar_select %p185, %s184, 7
          %s187 = smul.addr %s186, 2
          %s188 = smul.addr %s187, 2
          %s189 = scalar_lea.vmem %s0, %s188
          %s190 = smul.u32 4, %s14
        $region36: #{tpu_custom_call.1} parent=31 // pred_fallthru
          _
      $region32: #{tpu_custom_call.1} parent=5 // pred_fallthru
        _
      %p191 = scmp.le.s32.totalorder 1, %s14
      %p192 = scmp.lt.s32.totalorder %s14, 3
      %p193 = pnand %p191, %p192
      %p194 = pneg %p193
      // Predicated region
      $region37: #{tpu_custom_call.1} parent=5 // pred_check
        _
      $region38: #{tpu_custom_call.1} parent=5 // pred_check_branch
        %196 = sbr.rel (%p193) target = $region40
      $region39: #{tpu_custom_call.1} parent=5 // pred_region
        %s197 = ssub.s32 %s14, 1
        %s198 = smul.u32 4, %s19
        %p199 = scmp.lt.s32.totalorder %s198, 7
        %s200 = scalar_select %p199, %s198, 7
        %s201 = smul.addr %s200, 2
        %s202 = smul.addr %s201, 2
        %s203 = scalar_lea.vmem %s0, %s202
        %p204 = pneg %p40
        %p205 = pneg %p37
        %p206 = pneg %p61
        %p207 = pneg %p58
        %p208 = pneg %p82
        %p209 = pneg %p79
        %p210 = pneg %p103
        %p211 = pneg %p100
        %p212 = pneg %p124
        %p213 = pneg %p121
        %p214 = pneg %p150
        %p215 = pneg %p147
        %s216 = sand.u32 %s137, 1
        %s217 = scalar_lea.sflag [#allocation3], %s216
        %s218 = sand.u32 %s137, 1
        %s219 = smul.addr %s218, 16
        %s220 = scalar_lea.vmem [#allocation2], %s219
        %s221 = smul.u32 4, %s19
        %p222 = scmp.lt.s32.totalorder %s221, 7
        %s223 = scalar_select %p222, %s221, 7
        %s224 = smul.addr %s223, 2
        %s225 = smul.addr %s224, 2
        %s226 = scalar_lea.vmem %s0, %s225
        %s227 = smul.u32 4, %s19
        %s228 = smul.u32 4, %s19
        %v230 = vld [vmem:[%s226] sm:$0xf]
        %v231 = vld [vmem:[%s226 + $0x4] sm:$0xf]
        %v232 = vld [vmem:[%s226 + $0x8] sm:$0xf]
        %v233 = vld [vmem:[%s226 + $0xc] sm:$0xf]
        %v234 = vld [vmem:[%s1] sm:$0xf]
        %v235 = vld [vmem:[%s1 + $0x4] sm:$0xf]
        %v236 = vld [vmem:[%s1 + $0x8] sm:$0xf]
        %v237 = vld [vmem:[%s1 + $0xc] sm:$0xf]
        %v238 = vld [vmem:[%s1 + $0x10] sm:$0xf]
        %v239 = vld [vmem:[%s1 + $0x14] sm:$0xf]
        %v240 = vld [vmem:[%s1 + $0x18] sm:$0xf]
        %v241 = vld [vmem:[%s1 + $0x1c] sm:$0xf]
        %v242 = vld [vmem:[%s1 + $0x20] sm:$0xf]
        %v243 = vld [vmem:[%s1 + $0x24] sm:$0xf]
        %v244 = vld [vmem:[%s1 + $0x28] sm:$0xf]
        %v245 = vld [vmem:[%s1 + $0x2c] sm:$0xf]
        %v246 = vld [vmem:[%s1 + $0x30] sm:$0xf]
        %v247 = vld [vmem:[%s1 + $0x34] sm:$0xf]
        %v248 = vld [vmem:[%s1 + $0x38] sm:$0xf]
        %v249 = vld [vmem:[%s1 + $0x3c] sm:$0xf]
        %v250 = vld [vmem:[%s1 + $0x40] sm:$0xf]
        %v251 = vld [vmem:[%s1 + $0x44] sm:$0xf]
        %v252 = vld [vmem:[%s1 + $0x48] sm:$0xf]
        %v253 = vld [vmem:[%s1 + $0x4c] sm:$0xf]
        %v254 = vld [vmem:[%s1 + $0x50] sm:$0xf]
        %v255 = vld [vmem:[%s1 + $0x54] sm:$0xf]
        %v256 = vld [vmem:[%s1 + $0x58] sm:$0xf]
        %v257 = vld [vmem:[%s1 + $0x5c] sm:$0xf]
        %v258 = vld [vmem:[%s1 + $0x60] sm:$0xf]
        %v259 = vld [vmem:[%s1 + $0x64] sm:$0xf]
        %v260 = vld [vmem:[%s1 + $0x68] sm:$0xf]
        %v261 = vld [vmem:[%s1 + $0x6c] sm:$0xf]
        %v262 = vld [vmem:[%s1 + $0x70] sm:$0xf]
        %v263 = vld [vmem:[%s1 + $0x74] sm:$0xf]
        %v264 = vld [vmem:[%s1 + $0x78] sm:$0xf]
        %v265 = vld [vmem:[%s1 + $0x7c] sm:$0xf]
        %v266 = vld [vmem:[%s2] sm:$0x1]
        %v268 = vlaneseq
        %v269 = vshrl.u32 %v268, 7
        %v270 = vsub.s32 0, %v269
        %v271 = vrot.slane %v266, %v270
        %v277 = vcombine.low %v230, %v231
        %v278 = vcombine.low %v232, %v233
        %v280 = vunpack.c.l.s4 1983009808
        %v281 = vunpack.c.0.s8 %v280
        %v282 = vlaneseq
        %v283 = vshrl.u32 %v282, 7
        %v284 = vsub.s32 %v281, %v283
        %v285 = vrot.slane %v277, %v284
        %v287 = vunpack.c.l.s4 1983009808
        %v288 = vunpack.c.0.s8 %v287
        %v289 = vlaneseq
        %v290 = vshrl.u32 %v289, 7
        %v291 = vsub.s32 %v288, %v290
        %v292 = vrot.slane %v278, %v291
        %v293 = vcombine.low %v285, %v292
        %v294 = vcombine.high %v285, %v292
        %v329 = vunpack.c.l.b16 %v234
        %v330 = vunpack.c.l.b16 %v235
        %v331 = vunpack.c.l.b16 %v236
        %v332 = vunpack.c.l.b16 %v237
        %v333 = vunpack.c.l.b16 %v238
        %v334 = vunpack.c.l.b16 %v239
        %v335 = vunpack.c.l.b16 %v240
        %v336 = vunpack.c.l.b16 %v241
        %v337 = vunpack.c.l.b16 %v242
        %v338 = vunpack.c.l.b16 %v243
        %v339 = vunpack.c.l.b16 %v244
        %v340 = vunpack.c.l.b16 %v245
        %v341 = vunpack.c.l.b16 %v246
        %v342 = vunpack.c.l.b16 %v247
        %v343 = vunpack.c.l.b16 %v248
        %v344 = vunpack.c.l.b16 %v249
        %v345 = vunpack.c.l.b16 %v250
        %v346 = vunpack.c.l.b16 %v251
        %v347 = vunpack.c.l.b16 %v252
        %v348 = vunpack.c.l.b16 %v253
        %v349 = vunpack.c.l.b16 %v254
        %v350 = vunpack.c.l.b16 %v255
        %v351 = vunpack.c.l.b16 %v256
        %v352 = vunpack.c.l.b16 %v257
        %v353 = vunpack.c.l.b16 %v258
        %v354 = vunpack.c.l.b16 %v259
        %v355 = vunpack.c.l.b16 %v260
        %v356 = vunpack.c.l.b16 %v261
        %v357 = vunpack.c.l.b16 %v262
        %v358 = vunpack.c.l.b16 %v263
        %v359 = vunpack.c.l.b16 %v264
        %v360 = vunpack.c.l.b16 %v265
        %v361 = vpack.c.b16 %v330, %v329
        %v362 = vpack.c.b16 %v332, %v331
        %v363 = vpack.c.b16 %v334, %v333
        %v364 = vpack.c.b16 %v336, %v335
        %v365 = vpack.c.b16 %v338, %v337
        %v366 = vpack.c.b16 %v340, %v339
        %v367 = vpack.c.b16 %v342, %v341
        %v368 = vpack.c.b16 %v344, %v343
        %v369 = vpack.c.b16 %v346, %v345
        %v370 = vpack.c.b16 %v348, %v347
        %v371 = vpack.c.b16 %v350, %v349
        %v372 = vpack.c.b16 %v352, %v351
        %v373 = vpack.c.b16 %v354, %v353
        %v374 = vpack.c.b16 %v356, %v355
        %v375 = vpack.c.b16 %v358, %v357
        %v376 = vpack.c.b16 %v360, %v359
        %393 = vmatprep.subr.bf16.mxu0 0
        %394 = vmatpush1.bf16.msra.mxu0 %v361
        %395 = vmatprep.subr.bf16.mxu0 0
        %396 = vmatpush1.bf16.msra.mxu0 %v362
        %397 = vmatprep.subr.bf16.mxu0 0
        %398 = vmatpush1.bf16.msra.mxu0 %v363
        %399 = vmatprep.subr.bf16.mxu0 0
        %400 = vmatpush1.bf16.msra.mxu0 %v364
        %401 = vmatprep.subr.bf16.mxu0 0
        %402 = vmatpush1.bf16.msra.mxu0 %v365
        %403 = vmatprep.subr.bf16.mxu0 0
        %404 = vmatpush1.bf16.msra.mxu0 %v366
        %405 = vmatprep.subr.bf16.mxu0 0
        %406 = vmatpush1.bf16.msra.mxu0 %v367
        %407 = vmatprep.subr.bf16.mxu0 0
        %408 = vmatpush1.bf16.msra.mxu0 %v368
        %409 = vmatprep.subr.bf16.mxu0 0
        %410 = vmatpush1.bf16.msra.mxu0 %v369
        %411 = vmatprep.subr.bf16.mxu0 0
        %412 = vmatpush1.bf16.msra.mxu0 %v370
        %413 = vmatprep.subr.bf16.mxu0 0
        %414 = vmatpush1.bf16.msra.mxu0 %v371
        %415 = vmatprep.subr.bf16.mxu0 0
        %416 = vmatpush1.bf16.msra.mxu0 %v372
        %417 = vmatprep.subr.bf16.mxu0 0
        %418 = vmatpush1.bf16.msra.mxu0 %v373
        %419 = vmatprep.subr.bf16.mxu0 0
        %420 = vmatpush1.bf16.msra.mxu0 %v374
        %421 = vmatprep.subr.bf16.mxu0 0
        %422 = vmatpush1.bf16.msra.mxu0 %v375
        %423 = vmatprep.subr.bf16.mxu0 0
        %424 = vmatpush1.bf16.msra.mxu0 %v376
        %425 = vmatprep.mubr.bf16.mxu0 %v294
        %426 = vmatmul.mubr.bf16.gmra.mrb[0].mxu0 %v293
        %v427 = vpop.f32.mrb[0].mxu0
        %v428 = vadd.f32 %v271, %v427
        %v429 = vpop.f32.mrb[0].mxu0
        %v430 = vpop.f32.mrb[0].mxu0
        %v431 = vadd.f32 %v271, %v430
        %v432 = vpop.f32.mrb[0].mxu0
        %433 = vdwg.mxu0
        %v436 = vcombine.high %v428, %v428
        %v437 = vcombine.high %v431, %v431
        %v438 = vld [vmem:[%s3] sm:$0x1]
        %v439 = vrot.slane %v428, 7
        %v440 = vrot.slane %v436, 7
        %v441 = vrot.slane %v431, 7
        %v442 = vrot.slane %v437, 7
        %vm447 = vcmask 1040384
        %v448 = vsel %vm447, %v438, %v439
        %v449 = vsel %vm447, %v438, %v440
        %v450 = vsel %vm447, %v438, %v441
        %v451 = vsel %vm447, %v438, %v442
        %vm452 = vcmask 1044480
        %v453 = vsel %vm452, %v448, 0.0
        %v454 = vsel %vm452, %v449, 0.0
        %v455 = vsel %vm452, %v450, 0.0
        %v456 = vsel %vm452, %v451, 0.0
        %v457 = vld [vmem:[%s4] sm:$0xff]
        %v458 = vadd.f32 %v453, %v457
        %v459 = vadd.f32 %v454, %v457
        %v460 = vadd.f32 %v455, %v457
        %v461 = vadd.f32 %v456, %v457
        %v462 = vpack.c.bf16 %v458, %v458
        %v463 = vpack.c.bf16 %v459, %v459
        %v464 = vpack.c.bf16 %v460, %v460
        %v465 = vpack.c.bf16 %v461, %v461
        %vm466 = vcmask 257024
        %467 = vst.msk [vmem:[%s220] sm:$0xf] %vm466, %v462
        %468 = vst.msk [vmem:[%s220 + $0x4] sm:$0xf] %vm466, %v463
        %469 = vst.msk [vmem:[%s220 + $0x8] sm:$0xf] %vm466, %v464
        %470 = vst.msk [vmem:[%s220 + $0xc] sm:$0xf] %vm466, %v465
        %s471 = sand.u32 %s137, 1
        %s472 = scalar_lea.sflag [#allocation3], %s471
        %s473 = sand.u32 %s137, 1
        %s474 = smul.addr %s473, 16
        %s475 = scalar_lea.vmem [#allocation2], %s474
        // Predicated region
        $region41: #{tpu_custom_call.1} parent=39 // pred_check
          %p476 = pneg %p147
        $region42: #{tpu_custom_call.1} parent=39 // pred_check_branch
          %478 = sbr.rel (%p476) target = $region44
        $region43: #{tpu_custom_call.1} parent=39 // pred_region
          %s479 = smul.u32 4, %s19
          %s481 = ssub.s32 256, 256
          %482 = vsyncadd %s472, %s481
          %s483 = smul.addr %s479, 64
          %s484 = scalar_lea.hbm %s5, %s483
          %s485 = sshll.u32 %s475, 4
          %s486 = int_to_ptr.vmem [resolvable:$true] %s485
          %491 = dma.vmem_to_hbm [thread:$0]  %s486, 256, %s484, %s472, 64, 64, 4
        $region44: #{tpu_custom_call.1} parent=39 // pred_fallthru
          _
      $region40: #{tpu_custom_call.1} parent=5 // pred_fallthru
        _
      %p492 = scmp.le.s32.totalorder 2, %s14
      // Predicated region
      $region45: #{tpu_custom_call.1} parent=5 // pred_check
        %p493 = pneg %p492
      $region46: #{tpu_custom_call.1} parent=5 // pred_check_branch
        %495 = sbr.rel (%p493) target = $region48
      $region47: #{tpu_custom_call.1} parent=5 // pred_region
        %s496 = ssub.s32 %s14, 2
        // Predicated region
        $region49: #{tpu_custom_call.1} parent=47 // pred_check
          %p497 = pneg %p153
        $region50: #{tpu_custom_call.1} parent=47 // pred_check_branch
          %499 = sbr.rel (%p497) target = $region52
        $region51: #{tpu_custom_call.1} parent=47 // pred_region
          %s500 = sand.u32 %s138, 1
          %s501 = scalar_lea.sflag [#allocation3], %s500
          %s502 = sand.u32 %s138, 1
          %s503 = smul.addr %s502, 16
          %s504 = scalar_lea.vmem [#allocation2], %s503
          %505 = dma.done %s501, 256
        $region52: #{tpu_custom_call.1} parent=47 // pred_fallthru
          _
      $region48: #{tpu_custom_call.1} parent=5 // pred_fallthru
        _
    $region6: #{tpu_custom_call.1} parent=1 // loop_footer
      %s18 = sadd.s32 1, %s14
    $region7: #{tpu_custom_call.1} parent=1 // loop_footer_branch
      %13 = sbr.rel target = $region3
    $region8: #{tpu_custom_call.1} parent=1 // loop_exit
      _
    %506 = vsyncpa [#allocation3], 1
    %s507 = scalar_lea.sflag [#allocation3], 1
    %508 = vsyncpa %s507, 1

</llo_original>
